<compile_context>
chip_gen: v5e
topology: v5e:2x2
jax: 0.10.0
libtpu: 0.0.40
codegen_flags: <defaults>
</compile_context>

<pallas_src>
import jax
import jax.numpy as jnp
from jax.experimental import pallas as pl
from jax.experimental.pallas import tpu as pltpu


# Chunking: keep a few DMAs in flight for big tensors (2-4 outstanding).
# No VMEM is consumed, so nothing needs retuning between v5e/v6e (128 MiB
# VMEM) and v7x (64 MiB VMEM); HBM bandwidth is the only roofline.
_CHUNK_MIN_BYTES = 2 * 1024 * 1024   # only chunk tensors >= 2 MiB
_MAX_DMAS_PER_TENSOR = 4


def _chunk_bounds(dim0, num_chunks):
    """Split range(dim0) into `num_chunks` near-equal (start, size) pieces."""
    base, rem = divmod(dim0, num_chunks)
    bounds = []
    start = 0
    for j in range(num_chunks):
        size = base + (1 if j < rem else 0)
        bounds.append((start, size))
        start += size
    return bounds


def _plan_dmas(avals):
    """Static per-tensor DMA plan: None = whole-ref copy, else axis-0 chunks."""
    plans = []
    num_dmas = 0
    for a in avals:
        nbytes = a.size * a.dtype.itemsize
        if a.ndim >= 2 and a.shape[0] >= 2 and nbytes >= _CHUNK_MIN_BYTES:
            k = min(_MAX_DMAS_PER_TENSOR, a.shape[0])
            plans.append(_chunk_bounds(a.shape[0], k))
            num_dmas += k
        else:
            plans.append(None)
            num_dmas += 1
    return plans, num_dmas


def _make_copy_kernel(num_tensors, plans):
    """Kernel: one HBM->HBM DMA per tensor/chunk; start all, then drain."""

    def kernel(*refs):
        in_refs = refs[:num_tensors]
        out_refs = refs[num_tensors:2 * num_tensors]
        sem = refs[2 * num_tensors]
        copies = []
        k = 0
        # Issue every DMA first so they are all in flight ...
        for i, chunks in enumerate(plans):
            if chunks is None:
                cp = pltpu.make_async_copy(in_refs[i], out_refs[i], sem.at[k])
                cp.start()
                copies.append(cp)
                k += 1
            else:
                for (start, size) in chunks:
                    src = in_refs[i].at[pl.ds(start, size)]
                    dst = out_refs[i].at[pl.ds(start, size)]
                    cp = pltpu.make_async_copy(src, dst, sem.at[k])
                    cp.start()
                    copies.append(cp)
                    k += 1
        # ... then wait for all of them.
        for cp in copies:
            cp.wait()

    return kernel


@jax.jit
def _fused_identity_copy(*tensors):
    """One pallas_call copying every tensor HBM->HBM via async DMAs."""
    n = len(tensors)
    plans, num_dmas = _plan_dmas(tensors)
    total_bytes = sum(int(t.size) * t.dtype.itemsize for t in tensors)
    kernel = _make_copy_kernel(n, plans)
    return pl.pallas_call(
        kernel,
        out_shape=tuple(jax.ShapeDtypeStruct(t.shape, t.dtype) for t in tensors),
        in_specs=[pl.BlockSpec(memory_space=pl.ANY) for _ in tensors],
        out_specs=tuple(pl.BlockSpec(memory_space=pl.ANY) for _ in tensors),
        scratch_shapes=[pltpu.SemaphoreType.DMA((num_dmas,))],
        cost_estimate=pl.CostEstimate(
            flops=0, transcendentals=0, bytes_accessed=2 * total_bytes),
    )(*tensors)


class Network:
    """JAX/Pallas port of setka.base.Network (identity forward)."""

    def __init__(self, min_pallas_bytes=0):
        # The base class defines no parameters; forward() returns its input.
        # `min_pallas_bytes`: tensors smaller than this bypass the kernel
        # entirely (identity is a semantic no-op) -- for production use a
        # threshold of ~64-256 KiB removes pure launch overhead.  Default 0 so
        # the Pallas DMA path is exercised on every tensor in the demo; the
        # single fused pallas_call already amortizes launch cost over the list.
        self.min_pallas_bytes = min_pallas_bytes

    def forward(self, input):
        is_seq = isinstance(input, (list, tuple))
        tensors = [jnp.asarray(t) for t in (input if is_seq else [input])]

        # Tensors that actually go through the fused Pallas copy.
        idx = [
            i for i, t in enumerate(tensors)
            if t.ndim > 0 and t.size > 0
            and t.size * t.dtype.itemsize >= self.min_pallas_bytes
        ]
        if idx:
            copied = _fused_identity_copy(*(tensors[i] for i in idx))
            for i, o in zip(idx, copied):
                tensors[i] = o

        if is_seq:
            return type(input)(tensors)
        return tensors[0]

    def __call__(self, input):
        return self.forward(input)


if __name__ == "__main__":
    key = jax.random.PRNGKey(0)
    k1, k2, k3 = jax.random.split(key, 3)

    # Small NCHW-like image batch and a small 2-D batch (single whole-ref DMA).
    x_img = jax.random.normal(k1, (2, 4, 16, 16), dtype=jnp.float32)
    x_vec = jax.random.normal(k2, (2, 32), dtype=jnp.float32)
    # ~2.4 MiB tensor -> exercises the chunked (multiple outstanding DMAs) path.
    x_big = jax.random.normal(k3, (50, 100, 128), dtype=jnp.float32)
    # Native-dtype copies: bf16 stays packed, int32 values > 2**24 stay exact.
    x_bf16 = jax.random.normal(k1, (2, 8, 32), dtype=jnp.bfloat16)
    x_int = (jnp.arange(2 * 32, dtype=jnp.int32) + (1 << 24) + 1).reshape(2, 32)

    net = Network()
    inputs = [x_img, x_vec, x_big, x_bf16, x_int]
    outs = net(inputs)
    outs = [jax.block_until_ready(o) for o in outs]

    for o, x in zip(outs, inputs):
        assert o.shape == x.shape and o.dtype == x.dtype
        assert bool(jnp.array_equal(o, x))

    print("KERNEL_OK")
</pallas_src>

<mosaic_0001>
module attributes {stable_mosaic.version = 11 : i64} {
  func.func @kernel(%arg0: memref<2x4x16x16xf32, #tpu.memory_space<any>>, %arg1: memref<2x32xf32, #tpu.memory_space<any>>, %arg2: memref<50x100x128xf32, #tpu.memory_space<any>>, %arg3: memref<2x8x32xbf16, #tpu.memory_space<any>>, %arg4: memref<2x32xi32, #tpu.memory_space<any>>, %arg5: memref<2x4x16x16xf32, #tpu.memory_space<any>>, %arg6: memref<2x32xf32, #tpu.memory_space<any>>, %arg7: memref<50x100x128xf32, #tpu.memory_space<any>>, %arg8: memref<2x8x32xbf16, #tpu.memory_space<any>>, %arg9: memref<2x32xi32, #tpu.memory_space<any>>, %arg10: memref<8x!tpu.dma_semaphore, #tpu.memory_space<semaphore_mem>>) attributes {dimension_semantics = [], scalar_prefetch = 0 : i64, scratch_operands = 1 : i64, tpu.core_type = #tpu.core_type<tc>} {
    %c0_i32 = arith.constant 0 : i32
    %0 = tpu.memref_slice %arg10[%c0_i32] : memref<8x!tpu.dma_semaphore, #tpu.memory_space<semaphore_mem>> -> memref<1x!tpu.dma_semaphore, #tpu.memory_space<semaphore_mem>>
    %1 = tpu.memref_squeeze %0 : memref<1x!tpu.dma_semaphore, #tpu.memory_space<semaphore_mem>> -> memref<!tpu.dma_semaphore, #tpu.memory_space<semaphore_mem>>
    tpu.enqueue_dma source(%arg0 : memref<2x4x16x16xf32, #tpu.memory_space<any>>) target(%arg5 : memref<2x4x16x16xf32, #tpu.memory_space<any>>) target_semaphore(%1 : memref<!tpu.dma_semaphore, #tpu.memory_space<semaphore_mem>>)
    %c1_i32 = arith.constant 1 : i32
    %2 = tpu.memref_slice %arg10[%c1_i32] : memref<8x!tpu.dma_semaphore, #tpu.memory_space<semaphore_mem>> -> memref<1x!tpu.dma_semaphore, #tpu.memory_space<semaphore_mem>>
    %3 = tpu.memref_squeeze %2 : memref<1x!tpu.dma_semaphore, #tpu.memory_space<semaphore_mem>> -> memref<!tpu.dma_semaphore, #tpu.memory_space<semaphore_mem>>
    tpu.enqueue_dma source(%arg1 : memref<2x32xf32, #tpu.memory_space<any>>) target(%arg6 : memref<2x32xf32, #tpu.memory_space<any>>) target_semaphore(%3 : memref<!tpu.dma_semaphore, #tpu.memory_space<semaphore_mem>>)
    %c2_i32 = arith.constant 2 : i32
    %c0_i32_0 = arith.constant 0 : i32
    %c0_i32_1 = arith.constant 0 : i32
    %c0_i32_2 = arith.constant 0 : i32
    %4 = tpu.memref_slice %arg2[%c0_i32_0, %c0_i32_1, %c0_i32_2] : memref<50x100x128xf32, #tpu.memory_space<any>> -> memref<13x100x128xf32, #tpu.memory_space<any>>
    %c0_i32_3 = arith.constant 0 : i32
    %c0_i32_4 = arith.constant 0 : i32
    %c0_i32_5 = arith.constant 0 : i32
    %5 = tpu.memref_slice %arg7[%c0_i32_3, %c0_i32_4, %c0_i32_5] : memref<50x100x128xf32, #tpu.memory_space<any>> -> memref<13x100x128xf32, #tpu.memory_space<any>>
    %6 = tpu.memref_slice %arg10[%c2_i32] : memref<8x!tpu.dma_semaphore, #tpu.memory_space<semaphore_mem>> -> memref<1x!tpu.dma_semaphore, #tpu.memory_space<semaphore_mem>>
    %7 = tpu.memref_squeeze %6 : memref<1x!tpu.dma_semaphore, #tpu.memory_space<semaphore_mem>> -> memref<!tpu.dma_semaphore, #tpu.memory_space<semaphore_mem>>
    tpu.enqueue_dma source(%4 : memref<13x100x128xf32, #tpu.memory_space<any>>) target(%5 : memref<13x100x128xf32, #tpu.memory_space<any>>) target_semaphore(%7 : memref<!tpu.dma_semaphore, #tpu.memory_space<semaphore_mem>>)
    %c3_i32 = arith.constant 3 : i32
    %c13_i32 = arith.constant 13 : i32
    %c0_i32_6 = arith.constant 0 : i32
    %c0_i32_7 = arith.constant 0 : i32
    %8 = tpu.memref_slice %arg2[%c13_i32, %c0_i32_6, %c0_i32_7] : memref<50x100x128xf32, #tpu.memory_space<any>> -> memref<13x100x128xf32, #tpu.memory_space<any>>
    %c13_i32_8 = arith.constant 13 : i32
    %c0_i32_9 = arith.constant 0 : i32
    %c0_i32_10 = arith.constant 0 : i32
    %9 = tpu.memref_slice %arg7[%c13_i32_8, %c0_i32_9, %c0_i32_10] : memref<50x100x128xf32, #tpu.memory_space<any>> -> memref<13x100x128xf32, #tpu.memory_space<any>>
    %10 = tpu.memref_slice %arg10[%c3_i32] : memref<8x!tpu.dma_semaphore, #tpu.memory_space<semaphore_mem>> -> memref<1x!tpu.dma_semaphore, #tpu.memory_space<semaphore_mem>>
    %11 = tpu.memref_squeeze %10 : memref<1x!tpu.dma_semaphore, #tpu.memory_space<semaphore_mem>> -> memref<!tpu.dma_semaphore, #tpu.memory_space<semaphore_mem>>
    tpu.enqueue_dma source(%8 : memref<13x100x128xf32, #tpu.memory_space<any>>) target(%9 : memref<13x100x128xf32, #tpu.memory_space<any>>) target_semaphore(%11 : memref<!tpu.dma_semaphore, #tpu.memory_space<semaphore_mem>>)
    %c4_i32 = arith.constant 4 : i32
    %c26_i32 = arith.constant 26 : i32
    %c0_i32_11 = arith.constant 0 : i32
    %c0_i32_12 = arith.constant 0 : i32
    %12 = tpu.memref_slice %arg2[%c26_i32, %c0_i32_11, %c0_i32_12] : memref<50x100x128xf32, #tpu.memory_space<any>> -> memref<12x100x128xf32, #tpu.memory_space<any>>
    %c26_i32_13 = arith.constant 26 : i32
    %c0_i32_14 = arith.constant 0 : i32
    %c0_i32_15 = arith.constant 0 : i32
    %13 = tpu.memref_slice %arg7[%c26_i32_13, %c0_i32_14, %c0_i32_15] : memref<50x100x128xf32, #tpu.memory_space<any>> -> memref<12x100x128xf32, #tpu.memory_space<any>>
    %14 = tpu.memref_slice %arg10[%c4_i32] : memref<8x!tpu.dma_semaphore, #tpu.memory_space<semaphore_mem>> -> memref<1x!tpu.dma_semaphore, #tpu.memory_space<semaphore_mem>>
    %15 = tpu.memref_squeeze %14 : memref<1x!tpu.dma_semaphore, #tpu.memory_space<semaphore_mem>> -> memref<!tpu.dma_semaphore, #tpu.memory_space<semaphore_mem>>
    tpu.enqueue_dma source(%12 : memref<12x100x128xf32, #tpu.memory_space<any>>) target(%13 : memref<12x100x128xf32, #tpu.memory_space<any>>) target_semaphore(%15 : memref<!tpu.dma_semaphore, #tpu.memory_space<semaphore_mem>>)
    %c5_i32 = arith.constant 5 : i32
    %c38_i32 = arith.constant 38 : i32
    %c0_i32_16 = arith.constant 0 : i32
    %c0_i32_17 = arith.constant 0 : i32
    %16 = tpu.memref_slice %arg2[%c38_i32, %c0_i32_16, %c0_i32_17] : memref<50x100x128xf32, #tpu.memory_space<any>> -> memref<12x100x128xf32, #tpu.memory_space<any>>
    %c38_i32_18 = arith.constant 38 : i32
    %c0_i32_19 = arith.constant 0 : i32
    %c0_i32_20 = arith.constant 0 : i32
    %17 = tpu.memref_slice %arg7[%c38_i32_18, %c0_i32_19, %c0_i32_20] : memref<50x100x128xf32, #tpu.memory_space<any>> -> memref<12x100x128xf32, #tpu.memory_space<any>>
    %18 = tpu.memref_slice %arg10[%c5_i32] : memref<8x!tpu.dma_semaphore, #tpu.memory_space<semaphore_mem>> -> memref<1x!tpu.dma_semaphore, #tpu.memory_space<semaphore_mem>>
    %19 = tpu.memref_squeeze %18 : memref<1x!tpu.dma_semaphore, #tpu.memory_space<semaphore_mem>> -> memref<!tpu.dma_semaphore, #tpu.memory_space<semaphore_mem>>
    tpu.enqueue_dma source(%16 : memref<12x100x128xf32, #tpu.memory_space<any>>) target(%17 : memref<12x100x128xf32, #tpu.memory_space<any>>) target_semaphore(%19 : memref<!tpu.dma_semaphore, #tpu.memory_space<semaphore_mem>>)
    %c6_i32 = arith.constant 6 : i32
    %20 = tpu.memref_slice %arg10[%c6_i32] : memref<8x!tpu.dma_semaphore, #tpu.memory_space<semaphore_mem>> -> memref<1x!tpu.dma_semaphore, #tpu.memory_space<semaphore_mem>>
    %21 = tpu.memref_squeeze %20 : memref<1x!tpu.dma_semaphore, #tpu.memory_space<semaphore_mem>> -> memref<!tpu.dma_semaphore, #tpu.memory_space<semaphore_mem>>
    tpu.enqueue_dma source(%arg3 : memref<2x8x32xbf16, #tpu.memory_space<any>>) target(%arg8 : memref<2x8x32xbf16, #tpu.memory_space<any>>) target_semaphore(%21 : memref<!tpu.dma_semaphore, #tpu.memory_space<semaphore_mem>>)
    %c7_i32 = arith.constant 7 : i32
    %22 = tpu.memref_slice %arg10[%c7_i32] : memref<8x!tpu.dma_semaphore, #tpu.memory_space<semaphore_mem>> -> memref<1x!tpu.dma_semaphore, #tpu.memory_space<semaphore_mem>>
    %23 = tpu.memref_squeeze %22 : memref<1x!tpu.dma_semaphore, #tpu.memory_space<semaphore_mem>> -> memref<!tpu.dma_semaphore, #tpu.memory_space<semaphore_mem>>
    tpu.enqueue_dma source(%arg4 : memref<2x32xi32, #tpu.memory_space<any>>) target(%arg9 : memref<2x32xi32, #tpu.memory_space<any>>) target_semaphore(%23 : memref<!tpu.dma_semaphore, #tpu.memory_space<semaphore_mem>>)
    %c0_i32_21 = arith.constant 0 : i32
    %24 = tpu.memref_slice %arg10[%c0_i32_21] : memref<8x!tpu.dma_semaphore, #tpu.memory_space<semaphore_mem>> -> memref<1x!tpu.dma_semaphore, #tpu.memory_space<semaphore_mem>>
    %25 = tpu.memref_squeeze %24 : memref<1x!tpu.dma_semaphore, #tpu.memory_space<semaphore_mem>> -> memref<!tpu.dma_semaphore, #tpu.memory_space<semaphore_mem>>
    tpu.wait_dma2 semaphore(%25 : memref<!tpu.dma_semaphore, #tpu.memory_space<semaphore_mem>>) src(%arg0 : memref<2x4x16x16xf32, #tpu.memory_space<any>>) dst(%arg5 : memref<2x4x16x16xf32, #tpu.memory_space<any>>)
    %c1_i32_22 = arith.constant 1 : i32
    %26 = tpu.memref_slice %arg10[%c1_i32_22] : memref<8x!tpu.dma_semaphore, #tpu.memory_space<semaphore_mem>> -> memref<1x!tpu.dma_semaphore, #tpu.memory_space<semaphore_mem>>
    %27 = tpu.memref_squeeze %26 : memref<1x!tpu.dma_semaphore, #tpu.memory_space<semaphore_mem>> -> memref<!tpu.dma_semaphore, #tpu.memory_space<semaphore_mem>>
    tpu.wait_dma2 semaphore(%27 : memref<!tpu.dma_semaphore, #tpu.memory_space<semaphore_mem>>) src(%arg1 : memref<2x32xf32, #tpu.memory_space<any>>) dst(%arg6 : memref<2x32xf32, #tpu.memory_space<any>>)
    %c2_i32_23 = arith.constant 2 : i32
    %c0_i32_24 = arith.constant 0 : i32
    %c0_i32_25 = arith.constant 0 : i32
    %c0_i32_26 = arith.constant 0 : i32
    %28 = tpu.memref_slice %arg2[%c0_i32_24, %c0_i32_25, %c0_i32_26] : memref<50x100x128xf32, #tpu.memory_space<any>> -> memref<13x100x128xf32, #tpu.memory_space<any>>
    %c0_i32_27 = arith.constant 0 : i32
    %c0_i32_28 = arith.constant 0 : i32
    %c0_i32_29 = arith.constant 0 : i32
    %29 = tpu.memref_slice %arg7[%c0_i32_27, %c0_i32_28, %c0_i32_29] : memref<50x100x128xf32, #tpu.memory_space<any>> -> memref<13x100x128xf32, #tpu.memory_space<any>>
    %30 = tpu.memref_slice %arg10[%c2_i32_23] : memref<8x!tpu.dma_semaphore, #tpu.memory_space<semaphore_mem>> -> memref<1x!tpu.dma_semaphore, #tpu.memory_space<semaphore_mem>>
    %31 = tpu.memref_squeeze %30 : memref<1x!tpu.dma_semaphore, #tpu.memory_space<semaphore_mem>> -> memref<!tpu.dma_semaphore, #tpu.memory_space<semaphore_mem>>
    tpu.wait_dma2 semaphore(%31 : memref<!tpu.dma_semaphore, #tpu.memory_space<semaphore_mem>>) src(%28 : memref<13x100x128xf32, #tpu.memory_space<any>>) dst(%29 : memref<13x100x128xf32, #tpu.memory_space<any>>)
    %c3_i32_30 = arith.constant 3 : i32
    %c13_i32_31 = arith.constant 13 : i32
    %c0_i32_32 = arith.constant 0 : i32
    %c0_i32_33 = arith.constant 0 : i32
    %32 = tpu.memref_slice %arg2[%c13_i32_31, %c0_i32_32, %c0_i32_33] : memref<50x100x128xf32, #tpu.memory_space<any>> -> memref<13x100x128xf32, #tpu.memory_space<any>>
    %c13_i32_34 = arith.constant 13 : i32
    %c0_i32_35 = arith.constant 0 : i32
    %c0_i32_36 = arith.constant 0 : i32
    %33 = tpu.memref_slice %arg7[%c13_i32_34, %c0_i32_35, %c0_i32_36] : memref<50x100x128xf32, #tpu.memory_space<any>> -> memref<13x100x128xf32, #tpu.memory_space<any>>
    %34 = tpu.memref_slice %arg10[%c3_i32_30] : memref<8x!tpu.dma_semaphore, #tpu.memory_space<semaphore_mem>> -> memref<1x!tpu.dma_semaphore, #tpu.memory_space<semaphore_mem>>
    %35 = tpu.memref_squeeze %34 : memref<1x!tpu.dma_semaphore, #tpu.memory_space<semaphore_mem>> -> memref<!tpu.dma_semaphore, #tpu.memory_space<semaphore_mem>>
    tpu.wait_dma2 semaphore(%35 : memref<!tpu.dma_semaphore, #tpu.memory_space<semaphore_mem>>) src(%32 : memref<13x100x128xf32, #tpu.memory_space<any>>) dst(%33 : memref<13x100x128xf32, #tpu.memory_space<any>>)
    %c4_i32_37 = arith.constant 4 : i32
    %c26_i32_38 = arith.constant 26 : i32
    %c0_i32_39 = arith.constant 0 : i32
    %c0_i32_40 = arith.constant 0 : i32
    %36 = tpu.memref_slice %arg2[%c26_i32_38, %c0_i32_39, %c0_i32_40] : memref<50x100x128xf32, #tpu.memory_space<any>> -> memref<12x100x128xf32, #tpu.memory_space<any>>
    %c26_i32_41 = arith.constant 26 : i32
    %c0_i32_42 = arith.constant 0 : i32
    %c0_i32_43 = arith.constant 0 : i32
    %37 = tpu.memref_slice %arg7[%c26_i32_41, %c0_i32_42, %c0_i32_43] : memref<50x100x128xf32, #tpu.memory_space<any>> -> memref<12x100x128xf32, #tpu.memory_space<any>>
    %38 = tpu.memref_slice %arg10[%c4_i32_37] : memref<8x!tpu.dma_semaphore, #tpu.memory_space<semaphore_mem>> -> memref<1x!tpu.dma_semaphore, #tpu.memory_space<semaphore_mem>>
    %39 = tpu.memref_squeeze %38 : memref<1x!tpu.dma_semaphore, #tpu.memory_space<semaphore_mem>> -> memref<!tpu.dma_semaphore, #tpu.memory_space<semaphore_mem>>
    tpu.wait_dma2 semaphore(%39 : memref<!tpu.dma_semaphore, #tpu.memory_space<semaphore_mem>>) src(%36 : memref<12x100x128xf32, #tpu.memory_space<any>>) dst(%37 : memref<12x100x128xf32, #tpu.memory_space<any>>)
    %c5_i32_44 = arith.constant 5 : i32
    %c38_i32_45 = arith.constant 38 : i32
    %c0_i32_46 = arith.constant 0 : i32
    %c0_i32_47 = arith.constant 0 : i32
    %40 = tpu.memref_slice %arg2[%c38_i32_45, %c0_i32_46, %c0_i32_47] : memref<50x100x128xf32, #tpu.memory_space<any>> -> memref<12x100x128xf32, #tpu.memory_space<any>>
    %c38_i32_48 = arith.constant 38 : i32
    %c0_i32_49 = arith.constant 0 : i32
    %c0_i32_50 = arith.constant 0 : i32
    %41 = tpu.memref_slice %arg7[%c38_i32_48, %c0_i32_49, %c0_i32_50] : memref<50x100x128xf32, #tpu.memory_space<any>> -> memref<12x100x128xf32, #tpu.memory_space<any>>
    %42 = tpu.memref_slice %arg10[%c5_i32_44] : memref<8x!tpu.dma_semaphore, #tpu.memory_space<semaphore_mem>> -> memref<1x!tpu.dma_semaphore, #tpu.memory_space<semaphore_mem>>
    %43 = tpu.memref_squeeze %42 : memref<1x!tpu.dma_semaphore, #tpu.memory_space<semaphore_mem>> -> memref<!tpu.dma_semaphore, #tpu.memory_space<semaphore_mem>>
    tpu.wait_dma2 semaphore(%43 : memref<!tpu.dma_semaphore, #tpu.memory_space<semaphore_mem>>) src(%40 : memref<12x100x128xf32, #tpu.memory_space<any>>) dst(%41 : memref<12x100x128xf32, #tpu.memory_space<any>>)
    %c6_i32_51 = arith.constant 6 : i32
    %44 = tpu.memref_slice %arg10[%c6_i32_51] : memref<8x!tpu.dma_semaphore, #tpu.memory_space<semaphore_mem>> -> memref<1x!tpu.dma_semaphore, #tpu.memory_space<semaphore_mem>>
    %45 = tpu.memref_squeeze %44 : memref<1x!tpu.dma_semaphore, #tpu.memory_space<semaphore_mem>> -> memref<!tpu.dma_semaphore, #tpu.memory_space<semaphore_mem>>
    tpu.wait_dma2 semaphore(%45 : memref<!tpu.dma_semaphore, #tpu.memory_space<semaphore_mem>>) src(%arg3 : memref<2x8x32xbf16, #tpu.memory_space<any>>) dst(%arg8 : memref<2x8x32xbf16, #tpu.memory_space<any>>)
    %c7_i32_52 = arith.constant 7 : i32
    %46 = tpu.memref_slice %arg10[%c7_i32_52] : memref<8x!tpu.dma_semaphore, #tpu.memory_space<semaphore_mem>> -> memref<1x!tpu.dma_semaphore, #tpu.memory_space<semaphore_mem>>
    %47 = tpu.memref_squeeze %46 : memref<1x!tpu.dma_semaphore, #tpu.memory_space<semaphore_mem>> -> memref<!tpu.dma_semaphore, #tpu.memory_space<semaphore_mem>>
    tpu.wait_dma2 semaphore(%47 : memref<!tpu.dma_semaphore, #tpu.memory_space<semaphore_mem>>) src(%arg4 : memref<2x32xi32, #tpu.memory_space<any>>) dst(%arg9 : memref<2x32xi32, #tpu.memory_space<any>>)
    return
  }
}

</mosaic_0001>

<llo_original>
// kernel: _fused_identity_copy.1
$region0: #{_fused_identity_copy.1}
  #allocation0 [shape = 'u32[]', space=smem, size = 0x4, offset = 0x4, fixed_abs, tag = 'smem constant byte address 0x4 - core index']
  #allocation1 [shape = 'u32[72,128]{1,0:T(1,128)}', space=vmem, size = 0x9000, scoped, tag = 'internal scratch']
  #allocation2 [shape = 's32[8]{0}', space=sflag, size = 0x20, scoped, tag = 'scratch operand']
  #allocation3 [shape = 's32[]', space=sflag, size = 0x4, offset = 0, fixed_abs, tag = 'sflag constant byte address 0x0 - dummy sync flag']
  #allocation4 [shape = 'u32[0]{0}', space=smem, size = 0, offset = 0, fixed_abs, tag = 'smem constant byte address 0x0 - null']
  #allocation5 [shape = 's32[]', space=sflag, size = 0x4, offset = 0, fixed_abs, tag = 'sflag constant byte address 0x0 - dummy sync flag']
  #allocation6 [shape = 'u32[0]{0}', space=smem, size = 0, offset = 0, fixed_abs, tag = 'smem constant byte address 0x0 - null']
  #allocation7 [shape = 's32[]', space=sflag, size = 0x4, offset = 0, fixed_abs, tag = 'sflag constant byte address 0x0 - dummy sync flag']
  #allocation9 [shape = 's32[]', space=sflag, size = 0x4, offset = 0, fixed_abs, tag = 'sflag constant byte address 0x0 - dummy sync flag']
  #allocation11 [shape = 's32[]', space=sflag, size = 0x4, offset = 0, fixed_abs, tag = 'sflag constant byte address 0x0 - dummy sync flag']
  #allocation13 [shape = 's32[]', space=sflag, size = 0x4, offset = 0, fixed_abs, tag = 'sflag constant byte address 0x0 - dummy sync flag']
  #allocation15 [shape = 's32[]', space=sflag, size = 0x4, offset = 0, fixed_abs, tag = 'sflag constant byte address 0x0 - dummy sync flag']
  #allocation16 [shape = 'u32[0]{0}', space=smem, size = 0, offset = 0, fixed_abs, tag = 'smem constant byte address 0x0 - null']
  #allocation17 [shape = 's32[]', space=sflag, size = 0x4, offset = 0, fixed_abs, tag = 'sflag constant byte address 0x0 - dummy sync flag']
  #allocation18 [shape = 'u32[0]{0}', space=smem, size = 0, offset = 0, fixed_abs, tag = 'smem constant byte address 0x0 - null']
  %s0 = inlined_call_operand.hbm [shape: f32[2,4,16,16], index: 0, kind: input, shape index: {}]
  %s1 = inlined_call_operand.hbm [shape: f32[2,32], index: 1, kind: input, shape index: {}]
  %s2 = inlined_call_operand.hbm [shape: f32[50,100,128], index: 2, kind: input, shape index: {}]
  %s3 = inlined_call_operand.hbm [shape: bf16[2,8,32], index: 3, kind: input, shape index: {}]
  %s4 = inlined_call_operand.hbm [shape: s32[2,32], index: 4, kind: input, shape index: {}]
  %s5 = inlined_call_operand.hbm [shape: f32[2,4,16,16], index: 5, kind: output, shape index: {0}]
  %s6 = inlined_call_operand.hbm [shape: f32[2,32], index: 6, kind: output, shape index: {1}]
  %s7 = inlined_call_operand.hbm [shape: f32[50,100,128], index: 7, kind: output, shape index: {2}]
  %s8 = inlined_call_operand.hbm [shape: bf16[2,8,32], index: 8, kind: output, shape index: {3}]
  %s9 = inlined_call_operand.hbm [shape: s32[2,32], index: 9, kind: output, shape index: {4}]
  %10 = xla_tuple %s5, %s6, %s7, %s8, %s9
  %s11 = sld [smem:[#allocation0]]
  $region2: #{_fused_identity_copy.1} parent=0
    _
  %s13 = ssub.s32 1, %s11
  %s14 = scalar_select 0, %s13, %s11
  $region1: #{_fused_identity_copy.1} parent=0
    #allocation8 [shape = 'u32[3]{0}', space=smem, size = 0xc, scoped, tag = 'DMA stride descriptor']
    #allocation10 [shape = 'u32[3]{0}', space=smem, size = 0xc, scoped, tag = 'DMA stride descriptor']
    #allocation12 [shape = 'u32[3]{0}', space=smem, size = 0xc, scoped, tag = 'DMA stride descriptor']
    #allocation14 [shape = 'u32[3]{0}', space=smem, size = 0xc, scoped, tag = 'DMA stride descriptor']
    %s16 = sshll.u32 1, 14
    %s17 = sxor.u32 4294967295, %s16
    %s19 = sshll.u32 %s0, 4
    %s20 = int_to_ptr.hbm [resolvable:$true] %s19
    %s21 = sshll.u32 %s5, 4
    %s22 = int_to_ptr.hbm [resolvable:$true] %s21
    %25 = dma.general %s20, 2048, %s22, [#allocation2], [#allocation3], [#allocation4], 0, 0
    %s26 = scalar_lea.sflag [#allocation2], 1
    %s28 = sshll.u32 1, 14
    %s29 = sxor.u32 4294967295, %s28
    %s31 = sshll.u32 %s1, 4
    %s32 = int_to_ptr.hbm [resolvable:$true] %s31
    %s33 = sshll.u32 %s6, 4
    %s34 = int_to_ptr.hbm [resolvable:$true] %s33
    %37 = dma.general %s32, 32, %s34, %s26, [#allocation5], [#allocation6], 0, 0
    %s38 = scalar_lea.sflag [#allocation2], 2
    %s40 = sshll.u32 1, 14
    %s41 = sxor.u32 4294967295, %s40
    %s43 = sshll.u32 %s2, 4
    %s44 = int_to_ptr.hbm [resolvable:$true] %s43
    %s45 = sshll.u32 %s7, 4
    %s46 = int_to_ptr.hbm [resolvable:$true] %s45
    %50 = sst [smem:[#allocation8]] 1664
    %s51 = scalar_lea.smem [#allocation8], 1
    %52 = sst [smem:[%s51]] 1664
    %s53 = scalar_lea.smem [#allocation8], 2
    %54 = sst [smem:[%s53]] 100
    %56 = dma.general %s44, 20800, %s46, %s38, [#allocation7], [#allocation8], 0, 0
    %s57 = scalar_lea.hbm %s2, 1352
    %s58 = scalar_lea.hbm %s7, 1352
    %s59 = scalar_lea.sflag [#allocation2], 3
    %s61 = sshll.u32 1, 14
    %s62 = sxor.u32 4294967295, %s61
    %s64 = sshll.u32 %s57, 4
    %s65 = int_to_ptr.hbm [resolvable:$true] %s64
    %s66 = sshll.u32 %s58, 4
    %s67 = int_to_ptr.hbm [resolvable:$true] %s66
    %71 = sst [smem:[#allocation10]] 1664
    %s72 = scalar_lea.smem [#allocation10], 1
    %73 = sst [smem:[%s72]] 1664
    %s74 = scalar_lea.smem [#allocation10], 2
    %75 = sst [smem:[%s74]] 100
    %77 = dma.general %s65, 20800, %s67, %s59, [#allocation9], [#allocation10], 0, 0
    %s78 = scalar_lea.hbm %s2, 2704
    %s79 = scalar_lea.hbm %s7, 2704
    %s80 = scalar_lea.sflag [#allocation2], 4
    %s82 = sshll.u32 1, 14
    %s83 = sxor.u32 4294967295, %s82
    %s85 = sshll.u32 %s78, 4
    %s86 = int_to_ptr.hbm [resolvable:$true] %s85
    %s87 = sshll.u32 %s79, 4
    %s88 = int_to_ptr.hbm [resolvable:$true] %s87
    %92 = sst [smem:[#allocation12]] 1664
    %s93 = scalar_lea.smem [#allocation12], 1
    %94 = sst [smem:[%s93]] 1664
    %s95 = scalar_lea.smem [#allocation12], 2
    %96 = sst [smem:[%s95]] 100
    %98 = dma.general %s86, 19200, %s88, %s80, [#allocation11], [#allocation12], 0, 0
    %s99 = scalar_lea.hbm %s2, 3952
    %s100 = scalar_lea.hbm %s7, 3952
    %s101 = scalar_lea.sflag [#allocation2], 5
    %s103 = sshll.u32 1, 14
    %s104 = sxor.u32 4294967295, %s103
    %s106 = sshll.u32 %s99, 4
    %s107 = int_to_ptr.hbm [resolvable:$true] %s106
    %s108 = sshll.u32 %s100, 4
    %s109 = int_to_ptr.hbm [resolvable:$true] %s108
    %113 = sst [smem:[#allocation14]] 1664
    %s114 = scalar_lea.smem [#allocation14], 1
    %115 = sst [smem:[%s114]] 1664
    %s116 = scalar_lea.smem [#allocation14], 2
    %117 = sst [smem:[%s116]] 100
    %119 = dma.general %s107, 19200, %s109, %s101, [#allocation13], [#allocation14], 0, 0
    %s120 = scalar_lea.sflag [#allocation2], 6
    %s122 = sshll.u32 1, 14
    %s123 = sxor.u32 4294967295, %s122
    %s125 = sshll.u32 %s3, 4
    %s126 = int_to_ptr.hbm [resolvable:$true] %s125
    %s127 = sshll.u32 %s8, 4
    %s128 = int_to_ptr.hbm [resolvable:$true] %s127
    %131 = dma.general %s126, 128, %s128, %s120, [#allocation15], [#allocation16], 0, 0
    %s132 = scalar_lea.sflag [#allocation2], 7
    %s134 = sshll.u32 1, 14
    %s135 = sxor.u32 4294967295, %s134
    %s137 = sshll.u32 %s4, 4
    %s138 = int_to_ptr.hbm [resolvable:$true] %s137
    %s139 = sshll.u32 %s9, 4
    %s140 = int_to_ptr.hbm [resolvable:$true] %s139
    %143 = dma.general %s138, 32, %s140, %s132, [#allocation17], [#allocation18], 0, 0
    %s144 = smul.u32 2, 4
    %s145 = smul.u32 %s144, 16
    %s146 = smul.u32 %s145, 1
    %s147 = sshll.u32 %s146, 4
    %148 = dma.done [#allocation2], %s147
    %s149 = smul.u32 2, 1
    %s150 = sshll.u32 %s149, 4
    %151 = dma.done %s26, %s150
    %s152 = smul.u32 13, 100
    %s153 = smul.u32 %s152, 1
    %s154 = sshll.u32 %s153, 4
    %155 = dma.done %s38, %s154
    %s156 = sshll.u32 %s153, 4
    %157 = dma.done %s59, %s156
    %s158 = smul.u32 12, 100
    %s159 = smul.u32 %s158, 1
    %s160 = sshll.u32 %s159, 4
    %161 = dma.done %s80, %s160
    %s162 = sshll.u32 %s159, 4
    %163 = dma.done %s101, %s162
    %s164 = smul.u32 4, 2
    %s165 = smul.u32 %s164, 1
    %s166 = smul.u32 %s165, 1
    %s167 = sshll.u32 %s166, 4
    %168 = dma.done %s120, %s167
    %s169 = sshll.u32 %s149, 4
    %170 = dma.done %s132, %s169
  %171 = vsyncmov [#allocation2]
  %s172 = vpop.sfrf %171
  %p173 = scmp.eq.s32.totalorder %s172, 0
  %p174 = pneg %p173
  %176 = shalt.err (%p174)
  %s177 = scalar_lea.sflag [#allocation2], 1
  %178 = vsyncmov %s177
  %s179 = vpop.sfrf %178
  %p180 = scmp.eq.s32.totalorder %s179, 0
  %p181 = pneg %p180
  %183 = shalt.err (%p181)
  %s184 = scalar_lea.sflag [#allocation2], 2
  %185 = vsyncmov %s184
  %s186 = vpop.sfrf %185
  %p187 = scmp.eq.s32.totalorder %s186, 0
  %p188 = pneg %p187
  %190 = shalt.err (%p188)
  %s191 = scalar_lea.sflag [#allocation2], 3
  %192 = vsyncmov %s191
  %s193 = vpop.sfrf %192
  %p194 = scmp.eq.s32.totalorder %s193, 0
  %p195 = pneg %p194
  %197 = shalt.err (%p195)
  %s198 = scalar_lea.sflag [#allocation2], 4
  %199 = vsyncmov %s198
  %s200 = vpop.sfrf %199
  %p201 = scmp.eq.s32.totalorder %s200, 0
  %p202 = pneg %p201
  %204 = shalt.err (%p202)
  %s205 = scalar_lea.sflag [#allocation2], 5
  %206 = vsyncmov %s205
  %s207 = vpop.sfrf %206
  %p208 = scmp.eq.s32.totalorder %s207, 0
  %p209 = pneg %p208
  %211 = shalt.err (%p209)
  %s212 = scalar_lea.sflag [#allocation2], 6
  %213 = vsyncmov %s212
  %s214 = vpop.sfrf %213
  %p215 = scmp.eq.s32.totalorder %s214, 0
  %p216 = pneg %p215
  %218 = shalt.err (%p216)
  %s219 = scalar_lea.sflag [#allocation2], 7
  %220 = vsyncmov %s219
  %s221 = vpop.sfrf %220
  %p222 = scmp.eq.s32.totalorder %s221, 0
  %p223 = pneg %p222
  %225 = shalt.err (%p223)

</llo_original>
